<compile_context>
chip_gen: v7x
topology: tpu7x:2x2x1
jax: 0.10.0
libtpu: 0.0.40
codegen_flags: <defaults>
</compile_context>

<pallas_src>
import jax
import jax.numpy as jnp
from jax.experimental import pallas as pl
from jax.experimental.pallas import tpu as pltpu

NUM_CLASSES = 5


# ---------------------------------------------------------------------------
# Pallas kernels
# ---------------------------------------------------------------------------
def _linear_kernel(x_ref, w_ref, b_ref, o_ref):
    # y_pred = x @ W + b ; all f32 (PyTorch nn.Linear semantics), f32 accumulate.
    o_ref[...] = (
        jnp.dot(x_ref[...], w_ref[...], preferred_element_type=jnp.float32)
        + b_ref[...]
    )


def _make_loss_kernel(total_b, tb):
    """Fused linear + cross-entropy.

    Emits only a per-tile partial loss (scaled by 1/total_b); logits stay
    in-register / VMEM and are never written to HBM.  Rows past `total_b`
    (batch padding) are masked out.  Softmax math stays in f32.
    """
    inv_b = 1.0 / float(total_b)

    def kernel(x_ref, w_ref, b_ref, y_ref, loss_ref):
        logits = (
            jnp.dot(x_ref[...], w_ref[...], preferred_element_type=jnp.float32)
            + b_ref[...]
        )                                                         # (tb, C) f32

        # Numerically stable log-sum-exp, matching nn.CrossEntropyLoss.
        m = jnp.max(logits, axis=-1, keepdims=True)               # (tb, 1)
        lse = m + jnp.log(jnp.sum(jnp.exp(logits - m), axis=-1, keepdims=True))

        rows, c = logits.shape
        cls_iota = jax.lax.broadcasted_iota(jnp.int32, (rows, c), 1)
        onehot = (cls_iota == y_ref[...]).astype(jnp.float32)     # y_ref: (tb,1) i32
        picked = jnp.sum(logits * onehot, axis=-1, keepdims=True) # (tb, 1)
        per_row = lse - picked                                    # (tb, 1)

        # Mask padded tail rows (global row index >= total_b contributes 0).
        row_ids = (pl.program_id(0) * tb
                   + jax.lax.broadcasted_iota(jnp.int32, (rows, 1), 0))
        valid = (row_ids < total_b).astype(jnp.float32)

        partial = jnp.sum(per_row * valid, axis=0, keepdims=True) * inv_b  # (1,1)
        loss_ref[...] = partial.reshape(1, 1, 1)

    return kernel


# ---------------------------------------------------------------------------
# Wrapper glue
# ---------------------------------------------------------------------------
def _pick_tile(batch, block_b=None):
    """Batch tile size.  Default is large (8192 rows) to amortize per-grid-step
    overhead; rounded to a multiple of 8 (f32 sublane).  The batch is padded up
    to a tile multiple by the caller."""
    if block_b is None:
        block_b = 8192
    tb = min(int(block_b), batch)
    tb = max(8, ((tb + 7) // 8) * 8)
    n_tiles = (batch + tb - 1) // tb
    return tb, n_tiles


def _pad_rows(arr, b_pad):
    """Zero-pad the leading (batch) axis up to b_pad rows (no-op if equal)."""
    b = arr.shape[0]
    if b_pad == b:
        return arr
    pad = [(0, b_pad - b)] + [(0, 0)] * (arr.ndim - 1)
    return jnp.pad(arr, pad)


def linear_logits(x, w, b, *, block_b=None):
    """y_pred = x @ W + b  -> (B, 5) float32 (inference path)."""
    B, D = x.shape
    C = w.shape[1]
    tb, n_tiles = _pick_tile(B, block_b)
    b_pad = tb * n_tiles
    xp = _pad_rows(x, b_pad)
    b2d = b.reshape(1, C)

    out = pl.pallas_call(
        _linear_kernel,
        out_shape=jax.ShapeDtypeStruct((b_pad, C), jnp.float32),
        grid=(n_tiles,),
        in_specs=[
            pl.BlockSpec((tb, D), lambda i: (i, 0)),
            pl.BlockSpec((D, C), lambda i: (0, 0)),
            pl.BlockSpec((1, C), lambda i: (0, 0)),
        ],
        # TODO(synk): a lane-dense (C, B) transposed logits slab would avoid
        # masked vst on the C=5 axis, at the cost of a wrapper transpose.
        out_specs=pl.BlockSpec((tb, C), lambda i: (i, 0)),
        compiler_params=pltpu.CompilerParams(
            dimension_semantics=("parallel",)),
    )(xp, w, b2d)
    return out[:B] if b_pad != B else out


def cross_entropy_loss(x, y, w, b, *, block_b=None):
    """Mean cross-entropy of (x @ W + b) vs. integer targets y (training path).

    Single fused launch; logits never leave VMEM.  Returns a scalar f32.
    """
    B, D = x.shape
    C = w.shape[1]
    tb, n_tiles = _pick_tile(B, block_b)
    b_pad = tb * n_tiles
    xp = _pad_rows(x, b_pad)
    yp = _pad_rows(y.astype(jnp.int32).reshape(B, 1), b_pad)
    b2d = b.reshape(1, C)

    partials = pl.pallas_call(
        _make_loss_kernel(B, tb),
        out_shape=jax.ShapeDtypeStruct((n_tiles, 1, 1), jnp.float32),
        grid=(n_tiles,),
        in_specs=[
            pl.BlockSpec((tb, D), lambda i: (i, 0)),
            pl.BlockSpec((D, C), lambda i: (0, 0)),
            pl.BlockSpec((1, C), lambda i: (0, 0)),
            pl.BlockSpec((tb, 1), lambda i: (i, 0)),
        ],
        # Each grid step owns its own (1,1,1) partial block -> safe to shard
        # across TensorCores (v7x megacore).
        out_specs=pl.BlockSpec((1, 1, 1), lambda i: (i, 0, 0)),
        compiler_params=pltpu.CompilerParams(
            dimension_semantics=("parallel",)),
    )(xp, w, b2d, yp)
    return jnp.sum(partials)


def torch_model_forward(x, w, b, y=None, *, block_b=None):
    """Mirrors TorchModel.forward(x, y=None): loss if y given, else logits."""
    if y is not None:
        return cross_entropy_loss(x, y, w, b, block_b=block_b)
    return linear_logits(x, w, b, block_b=block_b)


# ---------------------------------------------------------------------------
# Main
# ---------------------------------------------------------------------------
if __name__ == "__main__":
    key = jax.random.PRNGKey(0)
    k_x, k_y, k_w, k_b = jax.random.split(key, 4)

    batch = 32
    input_size = 8

    # Deterministic param init (mimic nn.Linear uniform(-1/sqrt(in), 1/sqrt(in))).
    bound = 1.0 / (input_size ** 0.5)
    w = jax.random.uniform(k_w, (input_size, NUM_CLASSES), jnp.float32,
                           minval=-bound, maxval=bound)
    b = jax.random.uniform(k_b, (NUM_CLASSES,), jnp.float32,
                           minval=-bound, maxval=bound)
    x = jax.random.normal(k_x, (batch, input_size), jnp.float32)
    y = jax.random.randint(k_y, (batch,), 0, NUM_CLASSES, jnp.int32)

    # Inference path: y_pred = linear(x)  (single tile at this batch size).
    logits = jax.block_until_ready(torch_model_forward(x, w, b))

    # Training path: scalar cross-entropy loss, fused single launch.
    loss = jax.block_until_ready(torch_model_forward(x, w, b, y))

    # Multi-tile path (grid of 2 parallel tiles, partial-loss accumulation).
    logits_t = linear_logits(x, w, b, block_b=16)
    loss_t = cross_entropy_loss(x, y, w, b, block_b=16)
    logits_t, loss_t = jax.block_until_ready((logits_t, loss_t))

    # Ragged batch (exercises wrapper padding + in-kernel tail-row masking).
    Br = 20
    xr, yr = x[:Br], y[:Br]
    logits_r = linear_logits(xr, w, b, block_b=16)
    loss_r = cross_entropy_loss(xr, yr, w, b, block_b=16)
    logits_r, loss_r = jax.block_until_ready((logits_r, loss_r))

    # ----- correctness checks (exact f32 PyTorch-semantics reference) -----
    def ref_fwd(xv, yv):
        lg = xv @ w + b
        lse = jax.nn.logsumexp(lg, axis=-1)
        ls = jnp.mean(lse - lg[jnp.arange(xv.shape[0]), yv])
        return lg, ls

    ref_logits, ref_loss = ref_fwd(x, y)
    ref_logits_r, ref_loss_r = ref_fwd(xr, yr)

    assert logits.shape == (batch, NUM_CLASSES)
    assert jnp.allclose(logits, ref_logits, atol=1e-2, rtol=1e-2)
    assert jnp.allclose(loss, ref_loss, atol=1e-2, rtol=1e-2)
    assert jnp.allclose(logits_t, ref_logits, atol=1e-2, rtol=1e-2)
    assert jnp.allclose(loss_t, ref_loss, atol=1e-2, rtol=1e-2)
    assert logits_r.shape == (Br, NUM_CLASSES)
    assert jnp.allclose(logits_r, ref_logits_r, atol=1e-2, rtol=1e-2)
    assert jnp.allclose(loss_r, ref_loss_r, atol=1e-2, rtol=1e-2)

    print("KERNEL_OK")
</pallas_src>

<mosaic_0001>
module attributes {stable_mosaic.version = 11 : i64} {
  func.func @_linear_kernel(%arg0: i32, %arg1: memref<32x8xf32, #tpu.memory_space<vmem>>, %arg2: memref<8x5xf32, #tpu.memory_space<vmem>>, %arg3: memref<1x5xf32, #tpu.memory_space<vmem>>, %arg4: memref<32x5xf32, #tpu.memory_space<vmem>>) attributes {dimension_semantics = [#tpu.dimension_semantics<parallel>], iteration_bounds = array<i64: 1>, scalar_prefetch = 0 : i64, scratch_operands = 0 : i64, tpu.core_type = #tpu.core_type<tc>, window_params = [{transform_indices = @transform_0, window_bounds = array<i64: 32, 8>}, {pipeline_mode = #tpu.pipeline_mode<synchronous>, transform_indices = @transform_1, window_bounds = array<i64: 8, 5>}, {pipeline_mode = #tpu.pipeline_mode<synchronous>, transform_indices = @transform_2, window_bounds = array<i64: 1, 5>}, {transform_indices = @transform_3, window_bounds = array<i64: 32, 5>}]} {
    %c0 = arith.constant 0 : index
    %c0_0 = arith.constant 0 : index
    %0 = vector.load %arg1[%c0, %c0_0] : memref<32x8xf32, #tpu.memory_space<vmem>>, vector<32x8xf32>
    %c0_1 = arith.constant 0 : index
    %c0_2 = arith.constant 0 : index
    %1 = vector.load %arg2[%c0_1, %c0_2] : memref<8x5xf32, #tpu.memory_space<vmem>>, vector<8x5xf32>
    %cst = arith.constant dense<0.000000e+00> : vector<32x5xf32>
    %2 = tpu.matmul %0, %1, %cst {dimension_numbers = #tpu.dot_dimension_numbers<[1], [0], [0], [1], [0, 0, 1, 1], [], []>} : vector<32x8xf32>, vector<8x5xf32>, vector<32x5xf32> -> vector<32x5xf32>
    %c0_3 = arith.constant 0 : index
    %c0_4 = arith.constant 0 : index
    %3 = vector.load %arg3[%c0_3, %c0_4] : memref<1x5xf32, #tpu.memory_space<vmem>>, vector<1x5xf32>
    %4 = vector.broadcast %3 : vector<1x5xf32> to vector<32x5xf32>
    %5 = arith.addf %2, %4 : vector<32x5xf32>
    %c0_5 = arith.constant 0 : index
    %c0_6 = arith.constant 0 : index
    %6 = vector.load %arg4[%c0_5, %c0_6] : memref<32x5xf32, #tpu.memory_space<vmem>>, vector<32x5xf32>
    tpu.vector_store %arg4[%c0_5, %c0_6], %5 {strides = array<i32>} : memref<32x5xf32, #tpu.memory_space<vmem>>, vector<32x5xf32>,
    return
  }
  func.func @transform_0(%arg0: i32) -> (i32, i32) {
    %c0_i32 = arith.constant 0 : i32
    %c0_i32_0 = arith.constant 0 : i32
    return %arg0, %c0_i32 : i32, i32
  }
  func.func @transform_1(%arg0: i32) -> (i32, i32) {
    %c0_i32 = arith.constant 0 : i32
    %c0_i32_0 = arith.constant 0 : i32
    %c0_i32_1 = arith.constant 0 : i32
    return %c0_i32, %c0_i32_0 : i32, i32
  }
  func.func @transform_2(%arg0: i32) -> (i32, i32) {
    %c0_i32 = arith.constant 0 : i32
    %c0_i32_0 = arith.constant 0 : i32
    %c0_i32_1 = arith.constant 0 : i32
    return %c0_i32, %c0_i32_0 : i32, i32
  }
  func.func @transform_3(%arg0: i32) -> (i32, i32) {
    %c0_i32 = arith.constant 0 : i32
    %c0_i32_0 = arith.constant 0 : i32
    return %arg0, %c0_i32 : i32, i32
  }
}

</mosaic_0001>

<llo_original>
// kernel: tpu_custom_call.1
$region0: #{tpu_custom_call.1}
  #allocation0 [shape = 'u32[]', space=smem, size = 0x4, offset = 0x4, fixed_abs, tag = 'smem constant byte address 0x4 - core index']
  #allocation1 [shape = 'u32[144,128]{1,0:T(1,128)}', space=vmem, size = 0x12000, scoped, tag = 'internal scratch']
  %s0 = inlined_call_operand.vmem [shape: f32[32,8], index: 0, kind: input, shape index: {}]
  %s1 = inlined_call_operand.vmem [shape: f32[8,5], index: 1, kind: input, shape index: {}]
  %s2 = inlined_call_operand.vmem [shape: f32[1,5], index: 2, kind: input, shape index: {}]
  %s3 = inlined_call_operand.vmem [shape: f32[32,5], index: 3, kind: output, shape index: {}]
  %s4 = sld [smem:[#allocation0]]
  $region22: #{tpu_custom_call.1} parent=0
    _
  %s6 = ssub.s32 1, %s4
  %s7 = scalar_select 0, %s6, %s4
  // Predicated region
  $region2: #{tpu_custom_call.1} parent=0 // pred_check
    _
  $region3: #{tpu_custom_call.1} parent=0 // pred_check_branch
    %9 = sbr.rel (0) target = $region5
  $region4: #{tpu_custom_call.1} parent=0 // pred_region
    _
  $region5: #{tpu_custom_call.1} parent=0 // pred_fallthru
    _
  // Predicated region
  $region6: #{tpu_custom_call.1} parent=0 // pred_check
    _
  $region7: #{tpu_custom_call.1} parent=0 // pred_check_branch
    %11 = sbr.rel (0) target = $region9
  $region8: #{tpu_custom_call.1} parent=0 // pred_region
    _
  $region9: #{tpu_custom_call.1} parent=0 // pred_fallthru
    _
  // Predicated region
  $region10: #{tpu_custom_call.1} parent=0 // pred_check
    _
  $region11: #{tpu_custom_call.1} parent=0 // pred_check_branch
    %13 = sbr.rel (0) target = $region13
  $region12: #{tpu_custom_call.1} parent=0 // pred_region
    _
  $region13: #{tpu_custom_call.1} parent=0 // pred_fallthru
    _
  %v14 = vld [vmem:[%s0] sm:$0xff]
  %v15 = vld [vmem:[%s0 + $0x8] sm:$0xff]
  %v16 = vld [vmem:[%s0 + $0x10] sm:$0xff]
  %v17 = vld [vmem:[%s0 + $0x18] sm:$0xff]
  %v18 = vld [vmem:[%s1] sm:$0xff]
  %v19 = vld [vmem:[%s2] sm:$0x1]
  %v21 = vlaneseq
  %v22 = vshrl.u32 %v21, 7
  %v23 = vsub.s32 0, %v22
  %v24 = vrot.slane %v19, %v23
  %vm26 = vcmask 64512
  %v28 = vsel %vm26, %v14, 0
  %v31 = vsel %vm26, %v15, 0
  %v34 = vsel %vm26, %v16, 0
  %v37 = vsel %vm26, %v17, 0
  %39 = vmatprep.subr.mxu0 0.0
  %40 = vmatpush1.msra.mxu0 %v18
  %41 = vmatprep.subr.mxu0 0.0
  %42 = vmatpush1.msra.mxu0 0.0
  %43 = vmatprep.subr.mxu0 0.0
  %44 = vmatpush1.msra.mxu0 0.0
  %45 = vmatprep.subr.mxu0 0.0
  %46 = vmatpush1.msra.mxu0 0.0
  %47 = vmatprep.subr.mxu0 0.0
  %48 = vmatpush1.msra.mxu0 0.0
  %49 = vmatprep.subr.mxu0 0.0
  %50 = vmatpush1.msra.mxu0 0.0
  %51 = vmatprep.subr.mxu0 0.0
  %52 = vmatpush1.msra.mxu0 0.0
  %53 = vmatprep.subr.mxu0 0.0
  %54 = vmatpush1.msra.mxu0 0.0
  %55 = vmatprep.subr.mxu0 0.0
  %56 = vmatpush1.msra.mxu0 0.0
  %57 = vmatprep.subr.mxu0 0.0
  %58 = vmatpush1.msra.mxu0 0.0
  %59 = vmatprep.subr.mxu0 0.0
  %60 = vmatpush1.msra.mxu0 0.0
  %61 = vmatprep.subr.mxu0 0.0
  %62 = vmatpush1.msra.mxu0 0.0
  %63 = vmatprep.subr.mxu0 0.0
  %64 = vmatpush1.msra.mxu0 0.0
  %65 = vmatprep.subr.mxu0 0.0
  %66 = vmatpush1.msra.mxu0 0.0
  %67 = vmatprep.subr.mxu0 0.0
  %68 = vmatpush1.msra.mxu0 0.0
  %69 = vmatprep.subr.mxu0 0.0
  %70 = vmatpush1.msra.mxu0 0.0
  %71 = vmatprep.subr.mxu0 0.0
  %72 = vmatpush1.msra.mxu0 0.0
  %73 = vmatprep.subr.mxu0 0.0
  %74 = vmatpush1.msra.mxu0 0.0
  %75 = vmatprep.subr.mxu0 0.0
  %76 = vmatpush1.msra.mxu0 0.0
  %77 = vmatprep.subr.mxu0 0.0
  %78 = vmatpush1.msra.mxu0 0.0
  %79 = vmatprep.subr.mxu0 0.0
  %80 = vmatpush1.msra.mxu0 0.0
  %81 = vmatprep.subr.mxu0 0.0
  %82 = vmatpush1.msra.mxu0 0.0
  %83 = vmatprep.subr.mxu0 0.0
  %84 = vmatpush1.msra.mxu0 0.0
  %85 = vmatprep.subr.mxu0 0.0
  %86 = vmatpush1.msra.mxu0 0.0
  %87 = vmatprep.subr.mxu0 0.0
  %88 = vmatpush1.msra.mxu0 0.0
  %89 = vmatprep.subr.mxu0 0.0
  %90 = vmatpush1.msra.mxu0 0.0
  %91 = vmatprep.subr.mxu0 0.0
  %92 = vmatpush1.msra.mxu0 0.0
  %93 = vmatprep.subr.mxu0 0.0
  %94 = vmatpush1.msra.mxu0 0.0
  %95 = vmatprep.subr.mxu0 0.0
  %96 = vmatpush1.msra.mxu0 0.0
  %97 = vmatprep.subr.mxu0 0.0
  %98 = vmatpush1.msra.mxu0 0.0
  %99 = vmatprep.subr.mxu0 0.0
  %100 = vmatpush1.msra.mxu0 0.0
  %101 = vmatprep.subr.mxu0 0.0
  %102 = vmatpush1.msra.mxu0 0.0
  %103 = vmatprep.mubr.f32.mxu0 0.0
  %104 = vmatmul.mubr.f32.gmra.mrb[0].mxu0 %v28
  %v105 = vpop.f32.mrb[0].mxu0
  %v106 = vadd.f32 %v24, %v105
  %v107 = vpop.f32.mrb[0].mxu0
  %108 = vmatprep.mubr.f32.mxu0 0.0
  %109 = vmatmul.mubr.f32.gmra.mrb[0].mxu0 %v31
  %v110 = vpop.f32.mrb[0].mxu0
  %v111 = vadd.f32 %v24, %v110
  %v112 = vpop.f32.mrb[0].mxu0
  %113 = vmatprep.mubr.f32.mxu0 0.0
  %114 = vmatmul.mubr.f32.gmra.mrb[0].mxu0 %v34
  %v115 = vpop.f32.mrb[0].mxu0
  %v116 = vadd.f32 %v24, %v115
  %v117 = vpop.f32.mrb[0].mxu0
  %118 = vmatprep.mubr.f32.mxu0 0.0
  %119 = vmatmul.mubr.f32.gmra.mrb[0].mxu0 %v37
  %v120 = vpop.f32.mrb[0].mxu0
  %v121 = vadd.f32 %v24, %v120
  %v122 = vpop.f32.mrb[0].mxu0
  %123 = vdwg.mxu0
  %vm124 = vcmask 39936
  %125 = vst.msk [vmem:[%s3] sm:$0xff] %vm124, %v106
  %126 = vst.msk [vmem:[%s3 + $0x8] sm:$0xff] %vm124, %v111
  %127 = vst.msk [vmem:[%s3 + $0x10] sm:$0xff] %vm124, %v116
  %128 = vst.msk [vmem:[%s3 + $0x18] sm:$0xff] %vm124, %v121
  // Predicated region
  $region14: #{tpu_custom_call.1} parent=0 // pred_check
    _
  $region15: #{tpu_custom_call.1} parent=0 // pred_check_branch
    %130 = sbr.rel (0) target = $region17
  $region16: #{tpu_custom_call.1} parent=0 // pred_region
    _
  $region17: #{tpu_custom_call.1} parent=0 // pred_fallthru
    _
  // Predicated region
  $region18: #{tpu_custom_call.1} parent=0 // pred_check
    _
  $region19: #{tpu_custom_call.1} parent=0 // pred_check_branch
    %132 = sbr.rel (0) target = $region21
  $region20: #{tpu_custom_call.1} parent=0 // pred_region
    _
  $region21: #{tpu_custom_call.1} parent=0 // pred_fallthru
    _

</llo_original>
